<compile_context>
chip_gen: v7x
topology: tpu7x:2x2x1
jax: 0.10.0
libtpu: 0.0.40
codegen_flags: <defaults>
</compile_context>

<pallas_src>
import jax
import jax.numpy as jnp
from jax.experimental import pallas as pl
from jax.experimental.pallas import tpu as pltpu

# ----------------------------- config ---------------------------------------
BATCH = 8
INPUT_DIM = 16
HIDDEN_DIM = 32
OUTPUT_DIM = 8
DEPTH = 3            # number of hidden blocks in self.layers

HPAD = 128           # lane-dense padded width for hidden features / weight lanes
BIAS_ROWS = 16       # padded bias block (bf16 sublane tile = 16 rows)
BIAS_BASE = HPAD * (2 + DEPTH)            # row offset of the bias block
P_ROWS = BIAS_BASE + BIAS_ROWS            # total packed-parameter rows
TILE_M_MAX = 4096    # batch tile if batch ever scales up (sweep 2048-4096)


# ----------------------------- kernel ---------------------------------------
def mlp_kernel(x_ref, p_ref, o_ref):
    # One load of the (tiny) bias block; bias/ReLU math stays f32 (v5e-safe).
    biases = p_ref[BIAS_BASE:BIAS_BASE + BIAS_ROWS, :].astype(jnp.float32)  # [16,128]

    x = x_ref[...]                                   # [tile_m, 16] bf16

    # input_layer: Linear(input_dim, hidden) + ReLU.  K=16 matmul (MXU has huge
    # slack); padded hidden lanes stay zero through bias+ReLU.
    w_in = p_ref[0:INPUT_DIM, :]                     # [16, 128] bf16
    acc = jnp.dot(x, w_in, preferred_element_type=jnp.float32)
    h = jnp.maximum(acc + biases[0:1], 0.0).astype(jnp.bfloat16)   # live as bf16

    # hidden layers: Linear(hidden, hidden) + Dropout(0.0) + ReLU  (unrolled).
    for i in range(DEPTH):
        w = p_ref[(1 + i) * HPAD:(2 + i) * HPAD, :]  # [128, 128] bf16
        acc = jnp.dot(h, w, preferred_element_type=jnp.float32)
        h = jnp.maximum(acc + biases[1 + i:2 + i], 0.0).astype(jnp.bfloat16)

    # output_layer: Linear(hidden, output_dim), no activation.  Only the first
    # OUTPUT_DIM lanes are stored (narrow bf16 writeback).
    w_out = p_ref[(1 + DEPTH) * HPAD:(2 + DEPTH) * HPAD, :]        # [128, 128]
    y = jnp.dot(h, w_out, preferred_element_type=jnp.float32)
    y = y[:, :OUTPUT_DIM] + biases[1 + DEPTH:2 + DEPTH, :OUTPUT_DIM]
    o_ref[...] = y.astype(o_ref.dtype)                             # [tile_m, 8] bf16


# --------------------------- parameter packing -------------------------------
def pack_params(w_in, b_in, w_h, b_h, w_out, b_out):
    """Pack every weight/bias into one [P_ROWS, 128] bf16 buffer (zero padded)."""
    p = jnp.zeros((P_ROWS, HPAD), jnp.float32)
    p = p.at[:INPUT_DIM, :HIDDEN_DIM].set(w_in)
    for i in range(DEPTH):
        r = (1 + i) * HPAD
        p = p.at[r:r + HIDDEN_DIM, :HIDDEN_DIM].set(w_h[i])
    r = (1 + DEPTH) * HPAD
    p = p.at[r:r + HIDDEN_DIM, :OUTPUT_DIM].set(w_out)
    # bias block
    p = p.at[BIAS_BASE, :HIDDEN_DIM].set(b_in[0])
    for i in range(DEPTH):
        p = p.at[BIAS_BASE + 1 + i, :HIDDEN_DIM].set(b_h[i, 0])
    p = p.at[BIAS_BASE + 1 + DEPTH, :OUTPUT_DIM].set(b_out[0])
    return p.astype(jnp.bfloat16)


# ----------------------------- wrapper ---------------------------------------
def _round_up(v, m):
    return ((v + m - 1) // m) * m


def mlp_simple_forward(x, packed_params):
    b = x.shape[0]
    bpad16 = _round_up(b, 16)                       # bf16 sublane tile
    if bpad16 <= TILE_M_MAX:
        tile_m = bpad16
        n_tiles = 1
    else:
        # at least 2 (even) grid steps so v7x's two TensorCores both get work
        n_tiles = 2 * pl.cdiv(bpad16, 2 * TILE_M_MAX)
        tile_m = _round_up(pl.cdiv(bpad16, n_tiles), 16)
        n_tiles = pl.cdiv(bpad16, tile_m)
    bpad = n_tiles * tile_m

    # bf16 for the MXU; only pad batch rows (no lane padding) and only if needed.
    x_bf = x.astype(jnp.bfloat16)
    if bpad != b:
        x_bf = jnp.zeros((bpad, INPUT_DIM), jnp.bfloat16).at[:b].set(x_bf)

    # Right-size the VMEM limit from the actual footprint (double-buffered
    # in/out tiles + resident params + in-kernel f32/bf16 activation temps),
    # with 2x headroom, floor 4 MiB, cap 48 MiB.
    vmem_needed = (
        2 * tile_m * INPUT_DIM * 2          # x tiles (bf16, double-buffered)
        + 2 * tile_m * OUTPUT_DIM * 2       # out tiles (bf16, double-buffered)
        + 2 * P_ROWS * HPAD * 2             # packed params (bf16)
        + 6 * tile_m * HPAD * 4             # f32 accumulators / bf16 h temps
    )
    vmem_limit = int(min(max(2 * vmem_needed, 4 << 20), 48 << 20))

    out = pl.pallas_call(
        mlp_kernel,
        out_shape=jax.ShapeDtypeStruct((bpad, OUTPUT_DIM), jnp.bfloat16),
        grid_spec=pltpu.PrefetchScalarGridSpec(
            num_scalar_prefetch=0,
            grid=(n_tiles,),
            in_specs=[
                pl.BlockSpec((tile_m, INPUT_DIM), lambda i: (i, 0)),   # activations
                pl.BlockSpec((P_ROWS, HPAD), lambda i: (0, 0)),        # params: resident
            ],
            out_specs=pl.BlockSpec((tile_m, OUTPUT_DIM), lambda i: (i, 0)),
        ),
        compiler_params=pltpu.CompilerParams(
            dimension_semantics=("parallel",),   # v7x: split batch across TCs
            vmem_limit_bytes=vmem_limit,
        ),
    )(x_bf, packed_params)

    if bpad != b:
        out = out[:b]
    return out


# -------------------------- param init (deterministic) ----------------------
def init_linear(key, fan_in, fan_out):
    """PyTorch nn.Linear default init: U(-1/sqrt(fan_in), 1/sqrt(fan_in))."""
    kw, kb = jax.random.split(key)
    bound = 1.0 / jnp.sqrt(float(fan_in))
    w = jax.random.uniform(kw, (fan_in, fan_out), jnp.float32, -bound, bound)
    b = jax.random.uniform(kb, (1, fan_out), jnp.float32, -bound, bound)
    return w, b


def reference_forward(x, w_in, b_in, w_h, b_h, w_out, b_out):
    """Pure-JAX reference mirroring the kernel's bf16-operand / f32-accumulate math."""
    q = lambda a: a.astype(jnp.bfloat16).astype(jnp.float32)
    h = jnp.maximum(jnp.dot(q(x), q(w_in)) + q(b_in), 0.0)
    for i in range(DEPTH):
        h = jnp.maximum(jnp.dot(q(h), q(w_h[i])) + q(b_h[i]), 0.0)
    return jnp.dot(q(h), q(w_out)) + q(b_out)


if __name__ == "__main__":
    root = jax.random.PRNGKey(0)
    k_x, k_in, k_out, *k_hidden = jax.random.split(root, 3 + DEPTH)

    x = jax.random.normal(k_x, (BATCH, INPUT_DIM), jnp.float32)

    w_in, b_in = init_linear(k_in, INPUT_DIM, HIDDEN_DIM)
    w_out, b_out = init_linear(k_out, HIDDEN_DIM, OUTPUT_DIM)

    hs = [init_linear(k, HIDDEN_DIM, HIDDEN_DIM) for k in k_hidden]
    w_h = jnp.stack([w for w, _ in hs])          # [DEPTH, HIDDEN, HIDDEN]
    b_h = jnp.stack([b for _, b in hs])          # [DEPTH, 1, HIDDEN]

    params = pack_params(w_in, b_in, w_h, b_h, w_out, b_out)   # [656, 128] bf16

    out = mlp_simple_forward(x, params)
    out = jax.block_until_ready(out)

    ref = reference_forward(x, w_in, b_in, w_h, b_h, w_out, b_out)
    assert out.shape == (BATCH, OUTPUT_DIM)
    # Output is stored as bf16 now -> tolerance loosened vs. the f32 reference.
    out_f32 = out.astype(jnp.float32)
    err = float(jnp.max(jnp.abs(out_f32 - ref)))
    assert jnp.allclose(out_f32, ref, atol=2e-2, rtol=2e-2), err

    # TODO(synk): dropout_p > 0 (training mode) would need pltpu.prng_seed/prng_random_bits
    # masking; module defaults to p=0.0 (identity), which is what is implemented.
    print("KERNEL_OK")
</pallas_src>

<mosaic_0001>
module attributes {stable_mosaic.version = 11 : i64} {
  func.func @mlp_kernel(%arg0: i32, %arg1: memref<16x16xbf16, #tpu.memory_space<vmem>>, %arg2: memref<656x128xbf16, #tpu.memory_space<vmem>>, %arg3: memref<16x8xbf16, #tpu.memory_space<vmem>>) attributes {dimension_semantics = [#tpu.dimension_semantics<parallel>], iteration_bounds = array<i64: 1>, scalar_prefetch = 0 : i64, scratch_operands = 0 : i64, tpu.core_type = #tpu.core_type<tc>, window_params = [{transform_indices = @transform_0, window_bounds = array<i64: 16, 16>}, {pipeline_mode = #tpu.pipeline_mode<synchronous>, transform_indices = @transform_1, window_bounds = array<i64: 656, 128>}, {transform_indices = @transform_2, window_bounds = array<i64: 16, 8>}]} {
    %c640 = arith.constant 640 : index
    %c0 = arith.constant 0 : index
    %0 = vector.load %arg2[%c640, %c0] : memref<656x128xbf16, #tpu.memory_space<vmem>>, vector<16x128xbf16>
    %1 = arith.extf %0 : vector<16x128xbf16> to vector<16x128xf32>
    %c0_0 = arith.constant 0 : index
    %c0_1 = arith.constant 0 : index
    %2 = vector.load %arg1[%c0_0, %c0_1] : memref<16x16xbf16, #tpu.memory_space<vmem>>, vector<16x16xbf16>
    %c0_2 = arith.constant 0 : index
    %c0_3 = arith.constant 0 : index
    %3 = vector.load %arg2[%c0_2, %c0_3] : memref<656x128xbf16, #tpu.memory_space<vmem>>, vector<16x128xbf16>
    %cst = arith.constant dense<0.000000e+00> : vector<16x128xf32>
    %4 = tpu.matmul %2, %3, %cst {dimension_numbers = #tpu.dot_dimension_numbers<[1], [0], [0], [1], [0, 0, 1, 1], [], []>} : vector<16x16xbf16>, vector<16x128xbf16>, vector<16x128xf32> -> vector<16x128xf32>
    %5 = vector.extract_strided_slice %1 {offsets = [0, 0], sizes = [1, 128], strides = [1, 1]} : vector<16x128xf32> to vector<1x128xf32>
    %6 = vector.broadcast %5 : vector<1x128xf32> to vector<16x128xf32>
    %7 = arith.addf %4, %6 : vector<16x128xf32>
    %cst_4 = arith.constant 0.000000e+00 : f32
    %8 = vector.broadcast %cst_4 : f32 to vector<16x128xf32>
    %9 = arith.maximumf %7, %8 : vector<16x128xf32>
    %10 = arith.truncf %9 : vector<16x128xf32> to vector<16x128xbf16>
    %c128 = arith.constant 128 : index
    %c0_5 = arith.constant 0 : index
    %11 = vector.load %arg2[%c128, %c0_5] : memref<656x128xbf16, #tpu.memory_space<vmem>>, vector<128x128xbf16>
    %cst_6 = arith.constant dense<0.000000e+00> : vector<16x128xf32>
    %12 = tpu.matmul %10, %11, %cst_6 {dimension_numbers = #tpu.dot_dimension_numbers<[1], [0], [0], [1], [0, 0, 1, 1], [], []>} : vector<16x128xbf16>, vector<128x128xbf16>, vector<16x128xf32> -> vector<16x128xf32>
    %13 = vector.extract_strided_slice %1 {offsets = [1, 0], sizes = [1, 128], strides = [1, 1]} : vector<16x128xf32> to vector<1x128xf32>
    %14 = vector.broadcast %13 : vector<1x128xf32> to vector<16x128xf32>
    %15 = arith.addf %12, %14 : vector<16x128xf32>
    %cst_7 = arith.constant 0.000000e+00 : f32
    %16 = vector.broadcast %cst_7 : f32 to vector<16x128xf32>
    %17 = arith.maximumf %15, %16 : vector<16x128xf32>
    %18 = arith.truncf %17 : vector<16x128xf32> to vector<16x128xbf16>
    %c256 = arith.constant 256 : index
    %c0_8 = arith.constant 0 : index
    %19 = vector.load %arg2[%c256, %c0_8] : memref<656x128xbf16, #tpu.memory_space<vmem>>, vector<128x128xbf16>
    %cst_9 = arith.constant dense<0.000000e+00> : vector<16x128xf32>
    %20 = tpu.matmul %18, %19, %cst_9 {dimension_numbers = #tpu.dot_dimension_numbers<[1], [0], [0], [1], [0, 0, 1, 1], [], []>} : vector<16x128xbf16>, vector<128x128xbf16>, vector<16x128xf32> -> vector<16x128xf32>
    %21 = vector.extract_strided_slice %1 {offsets = [2, 0], sizes = [1, 128], strides = [1, 1]} : vector<16x128xf32> to vector<1x128xf32>
    %22 = vector.broadcast %21 : vector<1x128xf32> to vector<16x128xf32>
    %23 = arith.addf %20, %22 : vector<16x128xf32>
    %cst_10 = arith.constant 0.000000e+00 : f32
    %24 = vector.broadcast %cst_10 : f32 to vector<16x128xf32>
    %25 = arith.maximumf %23, %24 : vector<16x128xf32>
    %26 = arith.truncf %25 : vector<16x128xf32> to vector<16x128xbf16>
    %c384 = arith.constant 384 : index
    %c0_11 = arith.constant 0 : index
    %27 = vector.load %arg2[%c384, %c0_11] : memref<656x128xbf16, #tpu.memory_space<vmem>>, vector<128x128xbf16>
    %cst_12 = arith.constant dense<0.000000e+00> : vector<16x128xf32>
    %28 = tpu.matmul %26, %27, %cst_12 {dimension_numbers = #tpu.dot_dimension_numbers<[1], [0], [0], [1], [0, 0, 1, 1], [], []>} : vector<16x128xbf16>, vector<128x128xbf16>, vector<16x128xf32> -> vector<16x128xf32>
    %29 = vector.extract_strided_slice %1 {offsets = [3, 0], sizes = [1, 128], strides = [1, 1]} : vector<16x128xf32> to vector<1x128xf32>
    %30 = vector.broadcast %29 : vector<1x128xf32> to vector<16x128xf32>
    %31 = arith.addf %28, %30 : vector<16x128xf32>
    %cst_13 = arith.constant 0.000000e+00 : f32
    %32 = vector.broadcast %cst_13 : f32 to vector<16x128xf32>
    %33 = arith.maximumf %31, %32 : vector<16x128xf32>
    %34 = arith.truncf %33 : vector<16x128xf32> to vector<16x128xbf16>
    %c512 = arith.constant 512 : index
    %c0_14 = arith.constant 0 : index
    %35 = vector.load %arg2[%c512, %c0_14] : memref<656x128xbf16, #tpu.memory_space<vmem>>, vector<128x128xbf16>
    %cst_15 = arith.constant dense<0.000000e+00> : vector<16x128xf32>
    %36 = tpu.matmul %34, %35, %cst_15 {dimension_numbers = #tpu.dot_dimension_numbers<[1], [0], [0], [1], [0, 0, 1, 1], [], []>} : vector<16x128xbf16>, vector<128x128xbf16>, vector<16x128xf32> -> vector<16x128xf32>
    %37 = vector.extract_strided_slice %36 {offsets = [0, 0], sizes = [16, 8], strides = [1, 1]} : vector<16x128xf32> to vector<16x8xf32>
    %38 = vector.extract_strided_slice %1 {offsets = [4, 0], sizes = [1, 8], strides = [1, 1]} : vector<16x128xf32> to vector<1x8xf32>
    %39 = vector.broadcast %38 : vector<1x8xf32> to vector<16x8xf32>
    %40 = arith.addf %37, %39 : vector<16x8xf32>
    %41 = arith.truncf %40 : vector<16x8xf32> to vector<16x8xbf16>
    %c0_16 = arith.constant 0 : index
    %c0_17 = arith.constant 0 : index
    %42 = vector.load %arg3[%c0_16, %c0_17] : memref<16x8xbf16, #tpu.memory_space<vmem>>, vector<16x8xbf16>
    tpu.vector_store %arg3[%c0_16, %c0_17], %41 {strides = array<i32>} : memref<16x8xbf16, #tpu.memory_space<vmem>>, vector<16x8xbf16>,
    return
  }
  func.func @transform_0(%arg0: i32) -> (i32, i32) {
    %c0_i32 = arith.constant 0 : i32
    %c0_i32_0 = arith.constant 0 : i32
    return %arg0, %c0_i32 : i32, i32
  }
  func.func @transform_1(%arg0: i32) -> (i32, i32) {
    %c0_i32 = arith.constant 0 : i32
    %c0_i32_0 = arith.constant 0 : i32
    %c0_i32_1 = arith.constant 0 : i32
    return %c0_i32, %c0_i32_0 : i32, i32
  }
  func.func @transform_2(%arg0: i32) -> (i32, i32) {
    %c0_i32 = arith.constant 0 : i32
    %c0_i32_0 = arith.constant 0 : i32
    return %arg0, %c0_i32 : i32, i32
  }
}

</mosaic_0001>

<llo_original>
// kernel: tpu_custom_call.1
$region0: #{tpu_custom_call.1}
  #allocation0 [shape = 'u32[]', space=smem, size = 0x4, offset = 0x4, fixed_abs, tag = 'smem constant byte address 0x4 - core index']
  #allocation1 [shape = 'u32[144,128]{1,0:T(1,128)}', space=vmem, size = 0x12000, scoped, tag = 'internal scratch']
  %s0 = inlined_call_operand.hbm [shape: bf16[16,16], index: 0, kind: input, shape index: {}]
  %s1 = inlined_call_operand.hbm [shape: bf16[656,128], index: 1, kind: input, shape index: {}]
  %s2 = inlined_call_operand.vmem [shape: bf16[16,8], index: 2, kind: output, shape index: {}]
  %s3 = sld [smem:[#allocation0]]
  $region26: #{tpu_custom_call.1} parent=0
    _
  %s5 = ssub.s32 1, %s3
  %s6 = scalar_select 0, %s5, %s3
  $region1: #{tpu_custom_call.1} parent=0
    #allocation2 [shape = 'u8[4096]{0}', space=vmem, size = 0x1000, scoped, tag = 'input window, operand 0, single buffered']
    #allocation3 [shape = 's32[1]{0}', space=sflag, size = 0x4, scoped, tag = 'scoped memory for tpu_custom_call.1']
    #allocation4 [shape = 'u8[167936]{0}', space=vmem, size = 0x29000, scoped, tag = 'input window, operand 1, single buffered']
    #allocation5 [shape = 's32[1]{0}', space=sflag, size = 0x4, scoped, tag = 'scoped memory for tpu_custom_call.1']
    %7 = vsyncpa [#allocation3], 0
    %8 = vsyncpa [#allocation5], 0
    // Predicated region
    $region2: #{tpu_custom_call.1} parent=1 // pred_check
      _
    $region3: #{tpu_custom_call.1} parent=1 // pred_check_branch
      %10 = sbr.rel (0) target = $region5
    $region4: #{tpu_custom_call.1} parent=1 // pred_region
      %s12 = ssub.s32 128, 128
      %13 = vsyncadd [#allocation3], %s12
      %s14 = sshll.u32 [#allocation2], 4
      %s15 = int_to_ptr.vmem [resolvable:$true] %s14
      %20 = dma.hbm_to_vmem [thread:$0]  %s0, 128, %s15, [#allocation3], 64, 64, 4
    $region5: #{tpu_custom_call.1} parent=1 // pred_fallthru
      _
    // Predicated region
    $region6: #{tpu_custom_call.1} parent=1 // pred_check
      _
    $region7: #{tpu_custom_call.1} parent=1 // pred_check_branch
      %22 = sbr.rel (0) target = $region9
    $region8: #{tpu_custom_call.1} parent=1 // pred_region
      %s24 = ssub.s32 5248, 5248
      %25 = vsyncadd [#allocation5], %s24
      %s26 = sshll.u32 [#allocation4], 4
      %s27 = int_to_ptr.vmem [resolvable:$true] %s26
      %32 = dma.hbm_to_vmem [thread:$0]  %s1, 5248, %s27, [#allocation5], 64, 64, 4
    $region9: #{tpu_custom_call.1} parent=1 // pred_fallthru
      _
    // Predicated region
    $region10: #{tpu_custom_call.1} parent=1 // pred_check
      _
    $region11: #{tpu_custom_call.1} parent=1 // pred_check_branch
      %34 = sbr.rel (0) target = $region13
    $region12: #{tpu_custom_call.1} parent=1 // pred_region
      %35 = dma.done [#allocation3], 128
    $region13: #{tpu_custom_call.1} parent=1 // pred_fallthru
      _
    // Predicated region
    $region14: #{tpu_custom_call.1} parent=1 // pred_check
      _
    $region15: #{tpu_custom_call.1} parent=1 // pred_check_branch
      %37 = sbr.rel (0) target = $region17
    $region16: #{tpu_custom_call.1} parent=1 // pred_region
      %38 = dma.done [#allocation5], 5248
    $region17: #{tpu_custom_call.1} parent=1 // pred_fallthru
      _
    %v40 = vld [vmem:[#allocation4 + $0x140] sm:$0xf]
    %v41 = vunpack.c.l.bf16 %v40
    %v42 = vld [vmem:[#allocation2] sm:$0xf]
    %v43 = vld [vmem:[#allocation2 + $0x4] sm:$0xf]
    %v44 = vld [vmem:[#allocation4] sm:$0xf]
    %v45 = vld [vmem:[#allocation4 + $0x4] sm:$0xf]
    %v46 = vlaneseq
    %v47 = vshrl.u32 %v46, 7
    %v48 = vsub.s32 0, %v47
    %v49 = vrot.slane %v41, %v48
    %v52 = vunpack.c.l.b16 %v42
    %v53 = vunpack.c.l.b16 %v43
    %v54 = vpack.c.b16 %v53, %v52
    %v57 = vunpack.c.l.b16 %v44
    %v58 = vunpack.c.l.b16 %v45
    %v59 = vpack.c.b16 %v58, %v57
    %vm61 = vcmask 130048
    %v63 = vsel %vm61, %v54, 0
    %65 = vmatprep.subr.bf16.mxu0 0
    %66 = vmatpush1.bf16.msra.mxu0 %v59
    %67 = vmatprep.subr.bf16.mxu0 0
    %68 = vmatpush1.bf16.msra.mxu0 0
    %69 = vmatprep.subr.bf16.mxu0 0
    %70 = vmatpush1.bf16.msra.mxu0 0
    %71 = vmatprep.subr.bf16.mxu0 0
    %72 = vmatpush1.bf16.msra.mxu0 0
    %73 = vmatprep.subr.bf16.mxu0 0
    %74 = vmatpush1.bf16.msra.mxu0 0
    %75 = vmatprep.subr.bf16.mxu0 0
    %76 = vmatpush1.bf16.msra.mxu0 0
    %77 = vmatprep.subr.bf16.mxu0 0
    %78 = vmatpush1.bf16.msra.mxu0 0
    %79 = vmatprep.subr.bf16.mxu0 0
    %80 = vmatpush1.bf16.msra.mxu0 0
    %81 = vmatprep.subr.bf16.mxu0 0
    %82 = vmatpush1.bf16.msra.mxu0 0
    %83 = vmatprep.subr.bf16.mxu0 0
    %84 = vmatpush1.bf16.msra.mxu0 0
    %85 = vmatprep.subr.bf16.mxu0 0
    %86 = vmatpush1.bf16.msra.mxu0 0
    %87 = vmatprep.subr.bf16.mxu0 0
    %88 = vmatpush1.bf16.msra.mxu0 0
    %89 = vmatprep.subr.bf16.mxu0 0
    %90 = vmatpush1.bf16.msra.mxu0 0
    %91 = vmatprep.subr.bf16.mxu0 0
    %92 = vmatpush1.bf16.msra.mxu0 0
    %93 = vmatprep.subr.bf16.mxu0 0
    %94 = vmatpush1.bf16.msra.mxu0 0
    %95 = vmatprep.subr.bf16.mxu0 0
    %96 = vmatpush1.bf16.msra.mxu0 0
    %97 = vmatprep.mubr.bf16.mxu0 0
    %98 = vmatmul.mubr.bf16.gmra.mrb[0].mxu0 %v63
    %v99 = vpop.f32.mrb[0].mxu0
    %v100 = vadd.f32 %v49, %v99
    %v101 = vpop.f32.mrb[0].mxu0
    %v102 = vpop.f32.mrb[0].mxu0
    %v103 = vadd.f32 %v49, %v102
    %v104 = vpop.f32.mrb[0].mxu0
    %105 = vdwg.mxu0
    %v106 = vmax.f32 %v100, 0.0
    %v107 = vmax.f32 %v103, 0.0
    %v108 = vpack.c.bf16 %v107, %v106
    %v109 = vld [vmem:[#allocation4 + $0x40] sm:$0xf]
    %v110 = vld [vmem:[#allocation4 + $0x44] sm:$0xf]
    %v111 = vld [vmem:[#allocation4 + $0x48] sm:$0xf]
    %v112 = vld [vmem:[#allocation4 + $0x4c] sm:$0xf]
    %v113 = vld [vmem:[#allocation4 + $0x50] sm:$0xf]
    %v114 = vld [vmem:[#allocation4 + $0x54] sm:$0xf]
    %v115 = vld [vmem:[#allocation4 + $0x58] sm:$0xf]
    %v116 = vld [vmem:[#allocation4 + $0x5c] sm:$0xf]
    %v117 = vld [vmem:[#allocation4 + $0x60] sm:$0xf]
    %v118 = vld [vmem:[#allocation4 + $0x64] sm:$0xf]
    %v119 = vld [vmem:[#allocation4 + $0x68] sm:$0xf]
    %v120 = vld [vmem:[#allocation4 + $0x6c] sm:$0xf]
    %v121 = vld [vmem:[#allocation4 + $0x70] sm:$0xf]
    %v122 = vld [vmem:[#allocation4 + $0x74] sm:$0xf]
    %v123 = vld [vmem:[#allocation4 + $0x78] sm:$0xf]
    %v124 = vld [vmem:[#allocation4 + $0x7c] sm:$0xf]
    %v125 = vlaneseq
    %v126 = vshrl.u32 %v125, 7
    %v127 = vsub.s32 1, %v126
    %v128 = vrot.slane %v41, %v127
    %v145 = vunpack.c.l.b16 %v109
    %v146 = vunpack.c.l.b16 %v110
    %v147 = vunpack.c.l.b16 %v111
    %v148 = vunpack.c.l.b16 %v112
    %v149 = vunpack.c.l.b16 %v113
    %v150 = vunpack.c.l.b16 %v114
    %v151 = vunpack.c.l.b16 %v115
    %v152 = vunpack.c.l.b16 %v116
    %v153 = vunpack.c.l.b16 %v117
    %v154 = vunpack.c.l.b16 %v118
    %v155 = vunpack.c.l.b16 %v119
    %v156 = vunpack.c.l.b16 %v120
    %v157 = vunpack.c.l.b16 %v121
    %v158 = vunpack.c.l.b16 %v122
    %v159 = vunpack.c.l.b16 %v123
    %v160 = vunpack.c.l.b16 %v124
    %v161 = vpack.c.b16 %v146, %v145
    %v162 = vpack.c.b16 %v148, %v147
    %v163 = vpack.c.b16 %v150, %v149
    %v164 = vpack.c.b16 %v152, %v151
    %v165 = vpack.c.b16 %v154, %v153
    %v166 = vpack.c.b16 %v156, %v155
    %v167 = vpack.c.b16 %v158, %v157
    %v168 = vpack.c.b16 %v160, %v159
    %177 = vmatprep.subr.bf16.mxu0 0
    %178 = vmatpush1.bf16.msra.mxu0 %v161
    %179 = vmatprep.subr.bf16.mxu0 0
    %180 = vmatpush1.bf16.msra.mxu0 %v162
    %181 = vmatprep.subr.bf16.mxu0 0
    %182 = vmatpush1.bf16.msra.mxu0 %v163
    %183 = vmatprep.subr.bf16.mxu0 0
    %184 = vmatpush1.bf16.msra.mxu0 %v164
    %185 = vmatprep.subr.bf16.mxu0 0
    %186 = vmatpush1.bf16.msra.mxu0 %v165
    %187 = vmatprep.subr.bf16.mxu0 0
    %188 = vmatpush1.bf16.msra.mxu0 %v166
    %189 = vmatprep.subr.bf16.mxu0 0
    %190 = vmatpush1.bf16.msra.mxu0 %v167
    %191 = vmatprep.subr.bf16.mxu0 0
    %192 = vmatpush1.bf16.msra.mxu0 %v168
    %193 = vmatprep.subr.bf16.mxu0 0
    %194 = vmatpush1.bf16.msra.mxu0 0
    %195 = vmatprep.subr.bf16.mxu0 0
    %196 = vmatpush1.bf16.msra.mxu0 0
    %197 = vmatprep.subr.bf16.mxu0 0
    %198 = vmatpush1.bf16.msra.mxu0 0
    %199 = vmatprep.subr.bf16.mxu0 0
    %200 = vmatpush1.bf16.msra.mxu0 0
    %201 = vmatprep.subr.bf16.mxu0 0
    %202 = vmatpush1.bf16.msra.mxu0 0
    %203 = vmatprep.subr.bf16.mxu0 0
    %204 = vmatpush1.bf16.msra.mxu0 0
    %205 = vmatprep.subr.bf16.mxu0 0
    %206 = vmatpush1.bf16.msra.mxu0 0
    %207 = vmatprep.subr.bf16.mxu0 0
    %208 = vmatpush1.bf16.msra.mxu0 0
    %209 = vmatprep.mubr.bf16.mxu0 0
    %210 = vmatmul.mubr.bf16.gmra.mrb[0].mxu0 %v108
    %v211 = vpop.f32.mrb[0].mxu0
    %v212 = vadd.f32 %v128, %v211
    %v213 = vpop.f32.mrb[0].mxu0
    %v214 = vpop.f32.mrb[0].mxu0
    %v215 = vadd.f32 %v128, %v214
    %v216 = vpop.f32.mrb[0].mxu0
    %217 = vdwg.mxu0
    %v218 = vmax.f32 %v212, 0.0
    %v219 = vmax.f32 %v215, 0.0
    %v220 = vpack.c.bf16 %v219, %v218
    %v221 = vld [vmem:[#allocation4 + $0x80] sm:$0xf]
    %v222 = vld [vmem:[#allocation4 + $0x84] sm:$0xf]
    %v223 = vld [vmem:[#allocation4 + $0x88] sm:$0xf]
    %v224 = vld [vmem:[#allocation4 + $0x8c] sm:$0xf]
    %v225 = vld [vmem:[#allocation4 + $0x90] sm:$0xf]
    %v226 = vld [vmem:[#allocation4 + $0x94] sm:$0xf]
    %v227 = vld [vmem:[#allocation4 + $0x98] sm:$0xf]
    %v228 = vld [vmem:[#allocation4 + $0x9c] sm:$0xf]
    %v229 = vld [vmem:[#allocation4 + $0xa0] sm:$0xf]
    %v230 = vld [vmem:[#allocation4 + $0xa4] sm:$0xf]
    %v231 = vld [vmem:[#allocation4 + $0xa8] sm:$0xf]
    %v232 = vld [vmem:[#allocation4 + $0xac] sm:$0xf]
    %v233 = vld [vmem:[#allocation4 + $0xb0] sm:$0xf]
    %v234 = vld [vmem:[#allocation4 + $0xb4] sm:$0xf]
    %v235 = vld [vmem:[#allocation4 + $0xb8] sm:$0xf]
    %v236 = vld [vmem:[#allocation4 + $0xbc] sm:$0xf]
    %v237 = vlaneseq
    %v238 = vshrl.u32 %v237, 7
    %v239 = vsub.s32 2, %v238
    %v240 = vrot.slane %v41, %v239
    %v257 = vunpack.c.l.b16 %v221
    %v258 = vunpack.c.l.b16 %v222
    %v259 = vunpack.c.l.b16 %v223
    %v260 = vunpack.c.l.b16 %v224
    %v261 = vunpack.c.l.b16 %v225
    %v262 = vunpack.c.l.b16 %v226
    %v263 = vunpack.c.l.b16 %v227
    %v264 = vunpack.c.l.b16 %v228
    %v265 = vunpack.c.l.b16 %v229
    %v266 = vunpack.c.l.b16 %v230
    %v267 = vunpack.c.l.b16 %v231
    %v268 = vunpack.c.l.b16 %v232
    %v269 = vunpack.c.l.b16 %v233
    %v270 = vunpack.c.l.b16 %v234
    %v271 = vunpack.c.l.b16 %v235
    %v272 = vunpack.c.l.b16 %v236
    %v273 = vpack.c.b16 %v258, %v257
    %v274 = vpack.c.b16 %v260, %v259
    %v275 = vpack.c.b16 %v262, %v261
    %v276 = vpack.c.b16 %v264, %v263
    %v277 = vpack.c.b16 %v266, %v265
    %v278 = vpack.c.b16 %v268, %v267
    %v279 = vpack.c.b16 %v270, %v269
    %v280 = vpack.c.b16 %v272, %v271
    %289 = vmatprep.subr.bf16.mxu0 0
    %290 = vmatpush1.bf16.msra.mxu0 %v273
    %291 = vmatprep.subr.bf16.mxu0 0
    %292 = vmatpush1.bf16.msra.mxu0 %v274
    %293 = vmatprep.subr.bf16.mxu0 0
    %294 = vmatpush1.bf16.msra.mxu0 %v275
    %295 = vmatprep.subr.bf16.mxu0 0
    %296 = vmatpush1.bf16.msra.mxu0 %v276
    %297 = vmatprep.subr.bf16.mxu0 0
    %298 = vmatpush1.bf16.msra.mxu0 %v277
    %299 = vmatprep.subr.bf16.mxu0 0
    %300 = vmatpush1.bf16.msra.mxu0 %v278
    %301 = vmatprep.subr.bf16.mxu0 0
    %302 = vmatpush1.bf16.msra.mxu0 %v279
    %303 = vmatprep.subr.bf16.mxu0 0
    %304 = vmatpush1.bf16.msra.mxu0 %v280
    %305 = vmatprep.subr.bf16.mxu0 0
    %306 = vmatpush1.bf16.msra.mxu0 0
    %307 = vmatprep.subr.bf16.mxu0 0
    %308 = vmatpush1.bf16.msra.mxu0 0
    %309 = vmatprep.subr.bf16.mxu0 0
    %310 = vmatpush1.bf16.msra.mxu0 0
    %311 = vmatprep.subr.bf16.mxu0 0
    %312 = vmatpush1.bf16.msra.mxu0 0
    %313 = vmatprep.subr.bf16.mxu0 0
    %314 = vmatpush1.bf16.msra.mxu0 0
    %315 = vmatprep.subr.bf16.mxu0 0
    %316 = vmatpush1.bf16.msra.mxu0 0
    %317 = vmatprep.subr.bf16.mxu0 0
    %318 = vmatpush1.bf16.msra.mxu0 0
    %319 = vmatprep.subr.bf16.mxu0 0
    %320 = vmatpush1.bf16.msra.mxu0 0
    %321 = vmatprep.mubr.bf16.mxu0 0
    %322 = vmatmul.mubr.bf16.gmra.mrb[0].mxu0 %v220
    %v323 = vpop.f32.mrb[0].mxu0
    %v324 = vadd.f32 %v240, %v323
    %v325 = vpop.f32.mrb[0].mxu0
    %v326 = vpop.f32.mrb[0].mxu0
    %v327 = vadd.f32 %v240, %v326
    %v328 = vpop.f32.mrb[0].mxu0
    %329 = vdwg.mxu0
    %v330 = vmax.f32 %v324, 0.0
    %v331 = vmax.f32 %v327, 0.0
    %v332 = vpack.c.bf16 %v331, %v330
    %v333 = vld [vmem:[#allocation4 + $0xc0] sm:$0xf]
    %v334 = vld [vmem:[#allocation4 + $0xc4] sm:$0xf]
    %v335 = vld [vmem:[#allocation4 + $0xc8] sm:$0xf]
    %v336 = vld [vmem:[#allocation4 + $0xcc] sm:$0xf]
    %v337 = vld [vmem:[#allocation4 + $0xd0] sm:$0xf]
    %v338 = vld [vmem:[#allocation4 + $0xd4] sm:$0xf]
    %v339 = vld [vmem:[#allocation4 + $0xd8] sm:$0xf]
    %v340 = vld [vmem:[#allocation4 + $0xdc] sm:$0xf]
    %v341 = vld [vmem:[#allocation4 + $0xe0] sm:$0xf]
    %v342 = vld [vmem:[#allocation4 + $0xe4] sm:$0xf]
    %v343 = vld [vmem:[#allocation4 + $0xe8] sm:$0xf]
    %v344 = vld [vmem:[#allocation4 + $0xec] sm:$0xf]
    %v345 = vld [vmem:[#allocation4 + $0xf0] sm:$0xf]
    %v346 = vld [vmem:[#allocation4 + $0xf4] sm:$0xf]
    %v347 = vld [vmem:[#allocation4 + $0xf8] sm:$0xf]
    %v348 = vld [vmem:[#allocation4 + $0xfc] sm:$0xf]
    %v349 = vlaneseq
    %v350 = vshrl.u32 %v349, 7
    %v351 = vsub.s32 3, %v350
    %v352 = vrot.slane %v41, %v351
    %v369 = vunpack.c.l.b16 %v333
    %v370 = vunpack.c.l.b16 %v334
    %v371 = vunpack.c.l.b16 %v335
    %v372 = vunpack.c.l.b16 %v336
    %v373 = vunpack.c.l.b16 %v337
    %v374 = vunpack.c.l.b16 %v338
    %v375 = vunpack.c.l.b16 %v339
    %v376 = vunpack.c.l.b16 %v340
    %v377 = vunpack.c.l.b16 %v341
    %v378 = vunpack.c.l.b16 %v342
    %v379 = vunpack.c.l.b16 %v343
    %v380 = vunpack.c.l.b16 %v344
    %v381 = vunpack.c.l.b16 %v345
    %v382 = vunpack.c.l.b16 %v346
    %v383 = vunpack.c.l.b16 %v347
    %v384 = vunpack.c.l.b16 %v348
    %v385 = vpack.c.b16 %v370, %v369
    %v386 = vpack.c.b16 %v372, %v371
    %v387 = vpack.c.b16 %v374, %v373
    %v388 = vpack.c.b16 %v376, %v375
    %v389 = vpack.c.b16 %v378, %v377
    %v390 = vpack.c.b16 %v380, %v379
    %v391 = vpack.c.b16 %v382, %v381
    %v392 = vpack.c.b16 %v384, %v383
    %401 = vmatprep.subr.bf16.mxu0 0
    %402 = vmatpush1.bf16.msra.mxu0 %v385
    %403 = vmatprep.subr.bf16.mxu0 0
    %404 = vmatpush1.bf16.msra.mxu0 %v386
    %405 = vmatprep.subr.bf16.mxu0 0
    %406 = vmatpush1.bf16.msra.mxu0 %v387
    %407 = vmatprep.subr.bf16.mxu0 0
    %408 = vmatpush1.bf16.msra.mxu0 %v388
    %409 = vmatprep.subr.bf16.mxu0 0
    %410 = vmatpush1.bf16.msra.mxu0 %v389
    %411 = vmatprep.subr.bf16.mxu0 0
    %412 = vmatpush1.bf16.msra.mxu0 %v390
    %413 = vmatprep.subr.bf16.mxu0 0
    %414 = vmatpush1.bf16.msra.mxu0 %v391
    %415 = vmatprep.subr.bf16.mxu0 0
    %416 = vmatpush1.bf16.msra.mxu0 %v392
    %417 = vmatprep.subr.bf16.mxu0 0
    %418 = vmatpush1.bf16.msra.mxu0 0
    %419 = vmatprep.subr.bf16.mxu0 0
    %420 = vmatpush1.bf16.msra.mxu0 0
    %421 = vmatprep.subr.bf16.mxu0 0
    %422 = vmatpush1.bf16.msra.mxu0 0
    %423 = vmatprep.subr.bf16.mxu0 0
    %424 = vmatpush1.bf16.msra.mxu0 0
    %425 = vmatprep.subr.bf16.mxu0 0
    %426 = vmatpush1.bf16.msra.mxu0 0
    %427 = vmatprep.subr.bf16.mxu0 0
    %428 = vmatpush1.bf16.msra.mxu0 0
    %429 = vmatprep.subr.bf16.mxu0 0
    %430 = vmatpush1.bf16.msra.mxu0 0
    %431 = vmatprep.subr.bf16.mxu0 0
    %432 = vmatpush1.bf16.msra.mxu0 0
    %433 = vmatprep.mubr.bf16.mxu0 0
    %434 = vmatmul.mubr.bf16.gmra.mrb[0].mxu0 %v332
    %v435 = vpop.f32.mrb[0].mxu0
    %v436 = vadd.f32 %v352, %v435
    %v437 = vpop.f32.mrb[0].mxu0
    %v438 = vpop.f32.mrb[0].mxu0
    %v439 = vadd.f32 %v352, %v438
    %v440 = vpop.f32.mrb[0].mxu0
    %441 = vdwg.mxu0
    %v442 = vmax.f32 %v436, 0.0
    %v443 = vmax.f32 %v439, 0.0
    %v444 = vpack.c.bf16 %v443, %v442
    %v445 = vld [vmem:[#allocation4 + $0x100] sm:$0xf]
    %v446 = vld [vmem:[#allocation4 + $0x104] sm:$0xf]
    %v447 = vld [vmem:[#allocation4 + $0x108] sm:$0xf]
    %v448 = vld [vmem:[#allocation4 + $0x10c] sm:$0xf]
    %v449 = vld [vmem:[#allocation4 + $0x110] sm:$0xf]
    %v450 = vld [vmem:[#allocation4 + $0x114] sm:$0xf]
    %v451 = vld [vmem:[#allocation4 + $0x118] sm:$0xf]
    %v452 = vld [vmem:[#allocation4 + $0x11c] sm:$0xf]
    %v453 = vld [vmem:[#allocation4 + $0x120] sm:$0xf]
    %v454 = vld [vmem:[#allocation4 + $0x124] sm:$0xf]
    %v455 = vld [vmem:[#allocation4 + $0x128] sm:$0xf]
    %v456 = vld [vmem:[#allocation4 + $0x12c] sm:$0xf]
    %v457 = vld [vmem:[#allocation4 + $0x130] sm:$0xf]
    %v458 = vld [vmem:[#allocation4 + $0x134] sm:$0xf]
    %v459 = vld [vmem:[#allocation4 + $0x138] sm:$0xf]
    %v460 = vld [vmem:[#allocation4 + $0x13c] sm:$0xf]
    %v477 = vunpack.c.l.b16 %v445
    %v478 = vunpack.c.l.b16 %v446
    %v479 = vunpack.c.l.b16 %v447
    %v480 = vunpack.c.l.b16 %v448
    %v481 = vunpack.c.l.b16 %v449
    %v482 = vunpack.c.l.b16 %v450
    %v483 = vunpack.c.l.b16 %v451
    %v484 = vunpack.c.l.b16 %v452
    %v485 = vunpack.c.l.b16 %v453
    %v486 = vunpack.c.l.b16 %v454
    %v487 = vunpack.c.l.b16 %v455
    %v488 = vunpack.c.l.b16 %v456
    %v489 = vunpack.c.l.b16 %v457
    %v490 = vunpack.c.l.b16 %v458
    %v491 = vunpack.c.l.b16 %v459
    %v492 = vunpack.c.l.b16 %v460
    %v493 = vpack.c.b16 %v478, %v477
    %v494 = vpack.c.b16 %v480, %v479
    %v495 = vpack.c.b16 %v482, %v481
    %v496 = vpack.c.b16 %v484, %v483
    %v497 = vpack.c.b16 %v486, %v485
    %v498 = vpack.c.b16 %v488, %v487
    %v499 = vpack.c.b16 %v490, %v489
    %v500 = vpack.c.b16 %v492, %v491
    %509 = vmatprep.subr.bf16.mxu0 0
    %510 = vmatpush1.bf16.msra.mxu0 %v493
    %511 = vmatprep.subr.bf16.mxu0 0
    %512 = vmatpush1.bf16.msra.mxu0 %v494
    %513 = vmatprep.subr.bf16.mxu0 0
    %514 = vmatpush1.bf16.msra.mxu0 %v495
    %515 = vmatprep.subr.bf16.mxu0 0
    %516 = vmatpush1.bf16.msra.mxu0 %v496
    %517 = vmatprep.subr.bf16.mxu0 0
    %518 = vmatpush1.bf16.msra.mxu0 %v497
    %519 = vmatprep.subr.bf16.mxu0 0
    %520 = vmatpush1.bf16.msra.mxu0 %v498
    %521 = vmatprep.subr.bf16.mxu0 0
    %522 = vmatpush1.bf16.msra.mxu0 %v499
    %523 = vmatprep.subr.bf16.mxu0 0
    %524 = vmatpush1.bf16.msra.mxu0 %v500
    %525 = vmatprep.subr.bf16.mxu0 0
    %526 = vmatpush1.bf16.msra.mxu0 0
    %527 = vmatprep.subr.bf16.mxu0 0
    %528 = vmatpush1.bf16.msra.mxu0 0
    %529 = vmatprep.subr.bf16.mxu0 0
    %530 = vmatpush1.bf16.msra.mxu0 0
    %531 = vmatprep.subr.bf16.mxu0 0
    %532 = vmatpush1.bf16.msra.mxu0 0
    %533 = vmatprep.subr.bf16.mxu0 0
    %534 = vmatpush1.bf16.msra.mxu0 0
    %535 = vmatprep.subr.bf16.mxu0 0
    %536 = vmatpush1.bf16.msra.mxu0 0
    %537 = vmatprep.subr.bf16.mxu0 0
    %538 = vmatpush1.bf16.msra.mxu0 0
    %539 = vmatprep.subr.bf16.mxu0 0
    %540 = vmatpush1.bf16.msra.mxu0 0
    %541 = vmatprep.mubr.bf16.mxu0 0
    %542 = vmatmul.mubr.bf16.gmra.mrb[0].mxu0 %v444
    %v543 = vpop.f32.mrb[0].mxu0
    %v544 = vadd.f32 0.0, %v543
    %v545 = vpop.f32.mrb[0].mxu0
    %v546 = vpop.f32.mrb[0].mxu0
    %v547 = vadd.f32 0.0, %v546
    %v548 = vpop.f32.mrb[0].mxu0
    %549 = vdwg.mxu0
    %v550 = vlaneseq
    %v551 = vshrl.u32 %v550, 7
    %v552 = vsub.s32 4, %v551
    %v553 = vrot.slane %v41, %v552
    %v554 = vadd.f32 %v544, %v553
    %v555 = vadd.f32 %v547, %v553
    %v556 = vpack.c.bf16 %v555, %v554
    %v558 = vunpack.c.l.b16 %v556
    %v559 = vunpack.c.h.b16 %v556
    %v560 = vpack.c.b16 %v558, %v558
    %v561 = vpack.c.b16 %v559, %v559
    %vm564 = vcmask 60416
    %565 = vst.msk [vmem:[%s2] sm:$0xf] %vm564, %v560
    %566 = vst.msk [vmem:[%s2 + $0x4] sm:$0xf] %vm564, %v561
    // Predicated region
    $region18: #{tpu_custom_call.1} parent=1 // pred_check
      _
    $region19: #{tpu_custom_call.1} parent=1 // pred_check_branch
      %568 = sbr.rel (0) target = $region21
    $region20: #{tpu_custom_call.1} parent=1 // pred_region
      _
    $region21: #{tpu_custom_call.1} parent=1 // pred_fallthru
      _
    // Predicated region
    $region22: #{tpu_custom_call.1} parent=1 // pred_check
      _
    $region23: #{tpu_custom_call.1} parent=1 // pred_check_branch
      %570 = sbr.rel (0) target = $region25
    $region24: #{tpu_custom_call.1} parent=1 // pred_region
      _
    $region25: #{tpu_custom_call.1} parent=1 // pred_fallthru
      _
    %571 = vsyncpa [#allocation3], 1
    %572 = vsyncpa [#allocation5], 1

</llo_original>
